<compile_context>
chip_gen: v5e
topology: v5e:2x2
jax: 0.10.0
libtpu: 0.0.40
codegen_flags: <defaults>
</compile_context>

<pallas_src>
import functools
import math

import jax
import jax.numpy as jnp
from jax.experimental import pallas as pl
from jax.experimental.pallas import tpu as pltpu

_MIB = 1 << 20


def make_sinusoidal_pe(max_len: int, dim: int, dtype=jnp.float32) -> jnp.ndarray:
    """Deterministic sinusoidal table, shape (max_len, 1, dim).

    Store it in the activation dtype (e.g. bf16) to make the in-wrapper cast a no-op.
    Note: casting pe to bf16 matches a bf16 PyTorch module but loses precision vs an
    f32 pe buffer.
    """
    if dim % 2 != 0:
        raise ValueError(f"Cannot use sin/cos positional encoding with odd dim (got dim={dim})")
    position = jnp.arange(0, max_len, dtype=jnp.float32)[:, None]                 # (max_len, 1)
    div_term = jnp.exp(jnp.arange(0, dim, 2, dtype=jnp.float32)
                       * -(math.log(10000.0) / dim))                              # (dim/2,)
    angles = position * div_term                                                  # (max_len, dim/2)
    pe = jnp.zeros((max_len, dim), dtype=jnp.float32)
    pe = pe.at[:, 0::2].set(jnp.sin(angles))
    pe = pe.at[:, 1::2].set(jnp.cos(angles))
    return pe[:, None, :].astype(dtype)                                           # (max_len, 1, dim)


# ----------------------------------------------------------------------------- helpers

def _ceil(a: int, b: int) -> int:
    return -(-a // b)


def _sublane_quantum(itemsize: int) -> int:
    # Packed sublanes per vreg: 8 for f32, 16 for bf16, 32 for int8/fp8.
    return max(8, 32 // itemsize)


def _vmem_limit(block_bytes, margin=4 * _MIB, cap=64 * _MIB) -> int:
    # Every block is double-buffered by the BlockSpec pipeline; cap at 64 MiB (v7x physical).
    return int(min(2 * sum(block_bytes) + margin, cap))


def _choose_tiles(seq_len, batch, dim, itemsize, target_bytes, bb_unit):
    """Pick (seq_tile, batch_per_block) so one emb/out block is ~target_bytes.

    `bb_unit` is the granularity for splitting the batch axis (1 on the flattened path,
    8 on the 3-D path, 0 = never split).  The seq tile is aligned to the packed sublane
    count and, when the whole (non-trivial) tensor would fit a single block, halved so
    v7x's two TensorCores each get a parallel tile.
    """
    sub = _sublane_quantum(itemsize)
    row_bytes = batch * dim * itemsize
    if bb_unit and row_bytes > target_bytes and batch > bb_unit:
        bb = max(bb_unit, (target_bytes // (dim * itemsize)) // bb_unit * bb_unit)
        bb = min(bb, batch)
    else:
        bb = batch
    ts = max(1, target_bytes // (bb * dim * itemsize))
    ts = max(sub, ts - ts % sub)
    if ts >= seq_len:
        ts = seq_len
    # v7x has 2 TensorCores: guarantee >= 2 parallel tiles when there is real work.
    if (_ceil(seq_len, ts) * _ceil(batch, bb) == 1
            and seq_len * row_bytes > _MIB and seq_len >= 2 * sub):
        ts = _ceil(_ceil(seq_len, 2), sub) * sub
    return int(ts), int(bb)


# ----------------------------------------------------------------------------- kernels

def _pe_kernel_flat(emb_ref, pe_ref, out_ref, *, scale, batch_per_block, dim):
    # emb_ref/out_ref: (ts, batch_per_block*dim); pe_ref: (ts, dim).  dim % 128 == 0 so every
    # per-batch slice is a lane-aligned dense load/store; no pe replication is materialized.
    if batch_per_block == 1:
        out_ref[...] = emb_ref[...] * scale + pe_ref[...]
    else:
        pe_t = pe_ref[...]
        for b in range(batch_per_block):            # small static unroll (< 8)
            sl = pl.ds(b * dim, dim)
            out_ref[:, sl] = emb_ref[:, sl] * scale + pe_t


def _pe_kernel_bcast(emb_ref, pe_ref, out_ref, *, scale):
    # emb_ref/out_ref: (ts, bb, dim); pe_ref: (ts, 1, dim) broadcast over the batch axis.
    out_ref[...] = emb_ref[...] * scale + pe_ref[...]


def _pe_kernel_step(step_ref, emb_ref, pe_ref, out_ref, *, scale, pe_block_rows):
    # emb_ref/out_ref: (rt, dim); pe_ref: an 8-row (sublane-legal) window of the pe table
    # containing row `step`; pick the row in-kernel and broadcast it over the rt rows.
    row = step_ref[0] % pe_block_rows
    out_ref[...] = emb_ref[...] * scale + pe_ref[pl.ds(row, 1), :]


# ----------------------------------------------------------------------------- wrapper

def positional_encoding(emb: jnp.ndarray, pe: jnp.ndarray, step=None,
                        *, target_block_bytes: int = 4 * _MIB,
                        donate_emb: bool = False) -> jnp.ndarray:
    """emb: (seq_len, batch, dim); pe: (max_len, 1, dim). Returns emb*sqrt(dim) + pe[...]."""
    seq_len, batch, dim = emb.shape
    max_len = pe.shape[0]
    scale = math.sqrt(dim)
    itemsize = jnp.dtype(emb.dtype).itemsize
    pe = pe.astype(emb.dtype)                      # no-op if the table is stored in emb dtype
    aliases = {0: 0} if (donate_emb and step is None) else {}

    # ---------------- stepwise decode: pe[step] selected via scalar prefetch ----------------
    if step is not None:
        rows = seq_len * batch                     # pe[step] broadcasts over seq and batch
        emb2 = emb.reshape(rows, dim)              # batch on sublanes, dim on lanes
        pe2 = pe.reshape(max_len, dim)
        sub = _sublane_quantum(itemsize)
        rt = max(1, target_block_bytes // (dim * itemsize))
        rt = max(sub, rt - rt % sub)
        if rt >= rows:
            rt = rows
        nr = _ceil(rows, rt)
        pe_blk = 8 if max_len >= 8 else max_len    # sublane-legal pe window holding row `step`

        step_arr = jnp.asarray(step, dtype=jnp.int32).reshape((1,))
        kernel = functools.partial(_pe_kernel_step, scale=scale, pe_block_rows=pe_blk)
        grid_spec = pltpu.PrefetchScalarGridSpec(
            num_scalar_prefetch=1,
            grid=(nr,),
            in_specs=[
                pl.BlockSpec((rt, dim), lambda i, s: (i, 0)),
                pl.BlockSpec((pe_blk, dim), lambda i, s: (s[0] // pe_blk, 0)),
            ],
            out_specs=pl.BlockSpec((rt, dim), lambda i, s: (i, 0)),
        )
        out2 = pl.pallas_call(
            kernel,
            out_shape=jax.ShapeDtypeStruct((rows, dim), emb.dtype),
            grid_spec=grid_spec,
            compiler_params=pltpu.CompilerParams(
                dimension_semantics=("parallel",),
                vmem_limit_bytes=_vmem_limit(
                    [rt * dim * itemsize, rt * dim * itemsize, pe_blk * dim * itemsize]),
            ),
            cost_estimate=pl.CostEstimate(
                flops=2 * rows * dim, transcendentals=0,
                bytes_accessed=(2 * rows * dim + pe_blk * dim) * itemsize),
        )(step_arr, emb2, pe2)
        return out2.reshape(seq_len, batch, dim)

    # ---------------------------------- full-sequence path ----------------------------------
    if seq_len > max_len:
        raise ValueError(f"seq_len={seq_len} exceeds positional table max_len={max_len}")

    flops = 2 * seq_len * batch * dim
    bytes_acc = (2 * seq_len * batch * dim + seq_len * dim) * itemsize

    if dim % 128 == 0 and batch < 8:
        # Lane-dense (S, B*D) flattening; pe added per batch element with aligned slices.
        ts, bb = _choose_tiles(seq_len, batch, dim, itemsize, target_block_bytes, bb_unit=1)
        ns, nb = _ceil(seq_len, ts), _ceil(batch, bb)
        emb2 = emb.reshape(seq_len, batch * dim)
        pe2 = pe.reshape(max_len, dim)
        # Keep the pe block legal when the seq tile equals an 8-unaligned seq_len.
        pe_in = pe2 if ts % 8 == 0 else pe2[:seq_len]

        kernel = functools.partial(_pe_kernel_flat, scale=scale, batch_per_block=bb, dim=dim)
        out2 = pl.pallas_call(
            kernel,
            out_shape=jax.ShapeDtypeStruct((seq_len, batch * dim), emb.dtype),
            grid=(ns, nb),
            in_specs=[
                pl.BlockSpec((ts, bb * dim), lambda i, j: (i, j)),
                pl.BlockSpec((ts, dim), lambda i, j: (i, 0)),
            ],
            out_specs=pl.BlockSpec((ts, bb * dim), lambda i, j: (i, j)),
            compiler_params=pltpu.CompilerParams(
                dimension_semantics=("parallel", "parallel"),
                vmem_limit_bytes=_vmem_limit(
                    [ts * bb * dim * itemsize, ts * bb * dim * itemsize, ts * dim * itemsize]),
            ),
            cost_estimate=pl.CostEstimate(flops=flops, transcendentals=0,
                                          bytes_accessed=bytes_acc),
            input_output_aliases=aliases,
        )(emb2, pe_in)
        return out2.reshape(seq_len, batch, dim)

    # 3-D block path: (ts, bb, D) emb/out blocks, (ts, 1, D) pe broadcast over batch.
    bb_unit = 8 if batch >= 16 else 0
    ts, bb = _choose_tiles(seq_len, batch, dim, itemsize, target_block_bytes, bb_unit=bb_unit)
    ns, nb = _ceil(seq_len, ts), _ceil(batch, bb)
    kernel = functools.partial(_pe_kernel_bcast, scale=scale)
    out = pl.pallas_call(
        kernel,
        out_shape=jax.ShapeDtypeStruct((seq_len, batch, dim), emb.dtype),
        grid=(ns, nb),
        in_specs=[
            pl.BlockSpec((ts, bb, dim), lambda i, j: (i, j, 0)),
            pl.BlockSpec((ts, 1, dim), lambda i, j: (i, 0, 0)),
        ],
        out_specs=pl.BlockSpec((ts, bb, dim), lambda i, j: (i, j, 0)),
        compiler_params=pltpu.CompilerParams(
            dimension_semantics=("parallel", "parallel"),
            vmem_limit_bytes=_vmem_limit(
                [ts * bb * dim * itemsize, ts * bb * dim * itemsize, ts * dim * itemsize]),
        ),
        cost_estimate=pl.CostEstimate(flops=flops, transcendentals=0,
                                      bytes_accessed=bytes_acc),
        input_output_aliases=aliases,
    )(emb, pe)
    return out


# ------------------------------------------------------------------------------ tests

if __name__ == "__main__":
    key = jax.random.PRNGKey(0)

    # 1) Flattened lane-dense path (dim % 128 == 0, batch < 8), whole problem in one block.
    seq_len, batch, dim, max_len = 128, 2, 128, 512
    emb = jax.random.normal(key, (seq_len, batch, dim), dtype=jnp.float32)
    pe = make_sinusoidal_pe(max_len, dim)
    ref = emb * math.sqrt(dim) + pe[:seq_len]
    out = jax.block_until_ready(positional_encoding(emb, pe))
    assert jnp.allclose(out, ref, atol=1e-5, rtol=1e-5), "mismatch (flat, single block)"

    # 2) Small block budget -> multi-step seq grid (exercises the pipelined path).
    out_tiled = jax.block_until_ready(positional_encoding(emb, pe, target_block_bytes=32 * 1024))
    assert jnp.allclose(out_tiled, ref, atol=1e-5, rtol=1e-5), "mismatch (flat, seq tiling)"

    # 3) Stepwise decode path: pe row selected from the table via scalar prefetch.
    out_step = jax.block_until_ready(positional_encoding(emb[:1], pe, step=3))
    ref_step = emb[:1] * math.sqrt(dim) + pe[3]
    assert jnp.allclose(out_step, ref_step, atol=1e-5, rtol=1e-5), "mismatch (step)"

    # 4) 3-D broadcast path for batch >= 8.
    emb4 = jax.random.normal(jax.random.PRNGKey(1), (64, 8, dim), dtype=jnp.float32)
    out4 = jax.block_until_ready(positional_encoding(emb4, pe))
    ref4 = emb4 * math.sqrt(dim) + pe[:64]
    assert jnp.allclose(out4, ref4, atol=1e-5, rtol=1e-5), "mismatch (3-D batch>=8)"

    # 5) 3-D fallback when dim is not a 128 multiple.
    dim5, max_len5 = 64, 32
    emb5 = jax.random.normal(jax.random.PRNGKey(2), (16, 2, dim5), dtype=jnp.float32)
    pe5 = make_sinusoidal_pe(max_len5, dim5)
    out5 = jax.block_until_ready(positional_encoding(emb5, pe5))
    ref5 = emb5 * math.sqrt(dim5) + pe5[:16]
    assert jnp.allclose(out5, ref5, atol=1e-5, rtol=1e-5), "mismatch (3-D dim%128!=0)"

    print("KERNEL_OK")
</pallas_src>

<mosaic_0001>
module attributes {stable_mosaic.version = 11 : i64} {
  func.func @_pe_kernel_flat(%arg0: i32, %arg1: i32, %arg2: memref<128x256xf32, #tpu.memory_space<vmem>>, %arg3: memref<128x128xf32, #tpu.memory_space<vmem>>, %arg4: memref<128x256xf32, #tpu.memory_space<vmem>>) attributes {dimension_semantics = [#tpu.dimension_semantics<parallel>, #tpu.dimension_semantics<parallel>], iteration_bounds = array<i64: 1, 1>, scalar_prefetch = 0 : i64, scratch_operands = 0 : i64, tpu.core_type = #tpu.core_type<tc>, window_params = [{transform_indices = @transform_0, window_bounds = array<i64: 128, 256>}, {transform_indices = @transform_1, window_bounds = array<i64: 128, 128>}, {transform_indices = @transform_2, window_bounds = array<i64: 128, 256>}]} {
    %c0 = arith.constant 0 : index
    %c0_0 = arith.constant 0 : index
    %0 = vector.load %arg3[%c0, %c0_0] : memref<128x128xf32, #tpu.memory_space<vmem>>, vector<128x128xf32>
    %c0_1 = arith.constant 0 : index
    %c0_2 = arith.constant 0 : index
    %1 = vector.load %arg2[%c0_1, %c0_2] : memref<128x256xf32, #tpu.memory_space<vmem>>, vector<128x128xf32>
    %cst = arith.constant 11.3137083 : f32
    %2 = vector.broadcast %cst : f32 to vector<128x128xf32>
    %3 = arith.mulf %1, %2 : vector<128x128xf32>
    %4 = arith.addf %3, %0 : vector<128x128xf32>
    %c0_3 = arith.constant 0 : index
    %c0_4 = arith.constant 0 : index
    %5 = vector.load %arg4[%c0_3, %c0_4] : memref<128x256xf32, #tpu.memory_space<vmem>>, vector<128x128xf32>
    tpu.vector_store %arg4[%c0_3, %c0_4], %4 {strides = array<i32>} : memref<128x256xf32, #tpu.memory_space<vmem>>, vector<128x128xf32>,
    %c0_5 = arith.constant 0 : index
    %c128 = arith.constant 128 : index
    %6 = vector.load %arg2[%c0_5, %c128] : memref<128x256xf32, #tpu.memory_space<vmem>>, vector<128x128xf32>
    %cst_6 = arith.constant 11.3137083 : f32
    %7 = vector.broadcast %cst_6 : f32 to vector<128x128xf32>
    %8 = arith.mulf %6, %7 : vector<128x128xf32>
    %9 = arith.addf %8, %0 : vector<128x128xf32>
    %c0_7 = arith.constant 0 : index
    %c128_8 = arith.constant 128 : index
    %10 = vector.load %arg4[%c0_7, %c128_8] : memref<128x256xf32, #tpu.memory_space<vmem>>, vector<128x128xf32>
    tpu.vector_store %arg4[%c0_7, %c128_8], %9 {strides = array<i32>} : memref<128x256xf32, #tpu.memory_space<vmem>>, vector<128x128xf32>,
    return
  }
  func.func @transform_0(%arg0: i32, %arg1: i32) -> (i32, i32) {
    %c0_i32 = arith.constant 0 : i32
    return %arg0, %arg1 : i32, i32
  }
  func.func @transform_1(%arg0: i32, %arg1: i32) -> (i32, i32) {
    %c0_i32 = arith.constant 0 : i32
    %c0_i32_0 = arith.constant 0 : i32
    return %arg0, %c0_i32 : i32, i32
  }
  func.func @transform_2(%arg0: i32, %arg1: i32) -> (i32, i32) {
    %c0_i32 = arith.constant 0 : i32
    return %arg0, %arg1 : i32, i32
  }
}

</mosaic_0001>

<llo_original>
// kernel: tpu_custom_call.1
$region0: #{tpu_custom_call.1}
  #allocation0 [shape = 'u32[]', space=smem, size = 0x4, offset = 0x4, fixed_abs, tag = 'smem constant byte address 0x4 - core index']
  #allocation1 [shape = 'u32[72,128]{1,0:T(1,128)}', space=vmem, size = 0x9000, scoped, tag = 'internal scratch']
  %s0 = inlined_call_operand.hbm [shape: f32[128,256], index: 0, kind: input, shape index: {}]
  %s1 = inlined_call_operand.hbm [shape: f32[512,128], index: 1, kind: input, shape index: {}]
  %s2 = inlined_call_operand.hbm [shape: f32[128,256], index: 2, kind: output, shape index: {}]
  %s3 = sld [smem:[#allocation0]]
  $region26: #{tpu_custom_call.1} parent=0
    _
  %s5 = ssub.s32 1, %s3
  %s6 = scalar_select 0, %s5, %s3
  $region1: #{tpu_custom_call.1} parent=0
    #allocation2 [shape = 'u8[131072]{0}', space=vmem, size = 0x20000, scoped, tag = 'input window, operand 0, single buffered']
    #allocation3 [shape = 's32[1]{0}', space=sflag, size = 0x4, scoped, tag = 'scoped memory for tpu_custom_call.1']
    #allocation4 [shape = 's32[1]{0}', space=sflag, size = 0x4, scoped, tag = 'scoped memory for tpu_custom_call.1']
    #allocation5 [shape = 'u8[65536]{0}', space=vmem, size = 0x10000, scoped, tag = 'input window, operand 1, single buffered']
    #allocation6 [shape = 's32[1]{0}', space=sflag, size = 0x4, scoped, tag = 'scoped memory for tpu_custom_call.1']
    #allocation7 [shape = 'u8[131072]{0}', space=vmem, size = 0x20000, scoped, tag = 'output window, operand 0, single buffered']
    %7 = vsyncpa [#allocation3], 0
    %8 = vsyncpa [#allocation6], 0
    %9 = vsyncpa [#allocation4], 0
    // Predicated region
    $region2: #{tpu_custom_call.1} parent=1 // pred_check
      _
    $region3: #{tpu_custom_call.1} parent=1 // pred_check_branch
      %11 = sbr.rel (0) target = $region5
    $region4: #{tpu_custom_call.1} parent=1 // pred_region
      %13 = vsyncadd [#allocation3], 0
      %s14 = sshll.u32 %s0, 4
      %s15 = int_to_ptr.hbm [resolvable:$true] %s14
      %s16 = sshll.u32 [#allocation2], 4
      %s17 = int_to_ptr.vmem [resolvable:$true] %s16
      %22 = dma.hbm_to_vmem [thread:$0]  %s15, 4096, %s17, [#allocation3], 256, 256, 16
    $region5: #{tpu_custom_call.1} parent=1 // pred_fallthru
      _
    // Predicated region
    $region6: #{tpu_custom_call.1} parent=1 // pred_check
      _
    $region7: #{tpu_custom_call.1} parent=1 // pred_check_branch
      %24 = sbr.rel (0) target = $region9
    $region8: #{tpu_custom_call.1} parent=1 // pred_region
      %26 = vsyncadd [#allocation6], 0
      %s27 = sshll.u32 %s1, 4
      %s28 = int_to_ptr.hbm [resolvable:$true] %s27
      %s29 = sshll.u32 [#allocation5], 4
      %s30 = int_to_ptr.vmem [resolvable:$true] %s29
      %35 = dma.hbm_to_vmem [thread:$0]  %s28, 2048, %s30, [#allocation6], 128, 128, 8
    $region9: #{tpu_custom_call.1} parent=1 // pred_fallthru
      _
    // Predicated region
    $region10: #{tpu_custom_call.1} parent=1 // pred_check
      _
    $region11: #{tpu_custom_call.1} parent=1 // pred_check_branch
      %37 = sbr.rel (0) target = $region13
    $region12: #{tpu_custom_call.1} parent=1 // pred_region
      %39 = dma.done [#allocation3], 4096
    $region13: #{tpu_custom_call.1} parent=1 // pred_fallthru
      _
    // Predicated region
    $region14: #{tpu_custom_call.1} parent=1 // pred_check
      _
    $region15: #{tpu_custom_call.1} parent=1 // pred_check_branch
      %41 = sbr.rel (0) target = $region17
    $region16: #{tpu_custom_call.1} parent=1 // pred_region
      %43 = dma.done [#allocation6], 2048
    $region17: #{tpu_custom_call.1} parent=1 // pred_fallthru
      _
    %v44 = vld [vmem:[#allocation5] sm:$0xff]
    %v45 = vld [vmem:[#allocation5 + $0x8] sm:$0xff]
    %v46 = vld [vmem:[#allocation5 + $0x10] sm:$0xff]
    %v47 = vld [vmem:[#allocation5 + $0x18] sm:$0xff]
    %v48 = vld [vmem:[#allocation5 + $0x20] sm:$0xff]
    %v49 = vld [vmem:[#allocation5 + $0x28] sm:$0xff]
    %v50 = vld [vmem:[#allocation5 + $0x30] sm:$0xff]
    %v51 = vld [vmem:[#allocation5 + $0x38] sm:$0xff]
    %v52 = vld [vmem:[#allocation5 + $0x40] sm:$0xff]
    %v53 = vld [vmem:[#allocation5 + $0x48] sm:$0xff]
    %v54 = vld [vmem:[#allocation5 + $0x50] sm:$0xff]
    %v55 = vld [vmem:[#allocation5 + $0x58] sm:$0xff]
    %v56 = vld [vmem:[#allocation5 + $0x60] sm:$0xff]
    %v57 = vld [vmem:[#allocation5 + $0x68] sm:$0xff]
    %v58 = vld [vmem:[#allocation5 + $0x70] sm:$0xff]
    %v59 = vld [vmem:[#allocation5 + $0x78] sm:$0xff]
    %v60 = vld [vmem:[#allocation2] sm:$0xff]
    %v61 = vld [vmem:[#allocation2 + $0x10] sm:$0xff]
    %v62 = vld [vmem:[#allocation2 + $0x20] sm:$0xff]
    %v63 = vld [vmem:[#allocation2 + $0x30] sm:$0xff]
    %v64 = vld [vmem:[#allocation2 + $0x40] sm:$0xff]
    %v65 = vld [vmem:[#allocation2 + $0x50] sm:$0xff]
    %v66 = vld [vmem:[#allocation2 + $0x60] sm:$0xff]
    %v67 = vld [vmem:[#allocation2 + $0x70] sm:$0xff]
    %v68 = vld [vmem:[#allocation2 + $0x80] sm:$0xff]
    %v69 = vld [vmem:[#allocation2 + $0x90] sm:$0xff]
    %v70 = vld [vmem:[#allocation2 + $0xa0] sm:$0xff]
    %v71 = vld [vmem:[#allocation2 + $0xb0] sm:$0xff]
    %v72 = vld [vmem:[#allocation2 + $0xc0] sm:$0xff]
    %v73 = vld [vmem:[#allocation2 + $0xd0] sm:$0xff]
    %v74 = vld [vmem:[#allocation2 + $0xe0] sm:$0xff]
    %v75 = vld [vmem:[#allocation2 + $0xf0] sm:$0xff]
    %v76 = vmul.f32 %v60, 11.313708
    %v77 = vmul.f32 %v61, 11.313708
    %v78 = vmul.f32 %v62, 11.313708
    %v79 = vmul.f32 %v63, 11.313708
    %v80 = vmul.f32 %v64, 11.313708
    %v81 = vmul.f32 %v65, 11.313708
    %v82 = vmul.f32 %v66, 11.313708
    %v83 = vmul.f32 %v67, 11.313708
    %v84 = vmul.f32 %v68, 11.313708
    %v85 = vmul.f32 %v69, 11.313708
    %v86 = vmul.f32 %v70, 11.313708
    %v87 = vmul.f32 %v71, 11.313708
    %v88 = vmul.f32 %v72, 11.313708
    %v89 = vmul.f32 %v73, 11.313708
    %v90 = vmul.f32 %v74, 11.313708
    %v91 = vmul.f32 %v75, 11.313708
    %v92 = vadd.f32 %v76, %v44
    %v93 = vadd.f32 %v77, %v45
    %v94 = vadd.f32 %v78, %v46
    %v95 = vadd.f32 %v79, %v47
    %v96 = vadd.f32 %v80, %v48
    %v97 = vadd.f32 %v81, %v49
    %v98 = vadd.f32 %v82, %v50
    %v99 = vadd.f32 %v83, %v51
    %v100 = vadd.f32 %v84, %v52
    %v101 = vadd.f32 %v85, %v53
    %v102 = vadd.f32 %v86, %v54
    %v103 = vadd.f32 %v87, %v55
    %v104 = vadd.f32 %v88, %v56
    %v105 = vadd.f32 %v89, %v57
    %v106 = vadd.f32 %v90, %v58
    %v107 = vadd.f32 %v91, %v59
    %108 = vst [vmem:[#allocation7] sm:$0xff] %v92
    %109 = vst [vmem:[#allocation7 + $0x10] sm:$0xff] %v93
    %110 = vst [vmem:[#allocation7 + $0x20] sm:$0xff] %v94
    %111 = vst [vmem:[#allocation7 + $0x30] sm:$0xff] %v95
    %112 = vst [vmem:[#allocation7 + $0x40] sm:$0xff] %v96
    %113 = vst [vmem:[#allocation7 + $0x50] sm:$0xff] %v97
    %114 = vst [vmem:[#allocation7 + $0x60] sm:$0xff] %v98
    %115 = vst [vmem:[#allocation7 + $0x70] sm:$0xff] %v99
    %116 = vst [vmem:[#allocation7 + $0x80] sm:$0xff] %v100
    %117 = vst [vmem:[#allocation7 + $0x90] sm:$0xff] %v101
    %118 = vst [vmem:[#allocation7 + $0xa0] sm:$0xff] %v102
    %119 = vst [vmem:[#allocation7 + $0xb0] sm:$0xff] %v103
    %120 = vst [vmem:[#allocation7 + $0xc0] sm:$0xff] %v104
    %121 = vst [vmem:[#allocation7 + $0xd0] sm:$0xff] %v105
    %122 = vst [vmem:[#allocation7 + $0xe0] sm:$0xff] %v106
    %123 = vst [vmem:[#allocation7 + $0xf0] sm:$0xff] %v107
    %v124 = vld [vmem:[#allocation2 + $0x8] sm:$0xff]
    %v125 = vld [vmem:[#allocation2 + $0x18] sm:$0xff]
    %v126 = vld [vmem:[#allocation2 + $0x28] sm:$0xff]
    %v127 = vld [vmem:[#allocation2 + $0x38] sm:$0xff]
    %v128 = vld [vmem:[#allocation2 + $0x48] sm:$0xff]
    %v129 = vld [vmem:[#allocation2 + $0x58] sm:$0xff]
    %v130 = vld [vmem:[#allocation2 + $0x68] sm:$0xff]
    %v131 = vld [vmem:[#allocation2 + $0x78] sm:$0xff]
    %v132 = vld [vmem:[#allocation2 + $0x88] sm:$0xff]
    %v133 = vld [vmem:[#allocation2 + $0x98] sm:$0xff]
    %v134 = vld [vmem:[#allocation2 + $0xa8] sm:$0xff]
    %v135 = vld [vmem:[#allocation2 + $0xb8] sm:$0xff]
    %v136 = vld [vmem:[#allocation2 + $0xc8] sm:$0xff]
    %v137 = vld [vmem:[#allocation2 + $0xd8] sm:$0xff]
    %v138 = vld [vmem:[#allocation2 + $0xe8] sm:$0xff]
    %v139 = vld [vmem:[#allocation2 + $0xf8] sm:$0xff]
    %v140 = vmul.f32 %v124, 11.313708
    %v141 = vmul.f32 %v125, 11.313708
    %v142 = vmul.f32 %v126, 11.313708
    %v143 = vmul.f32 %v127, 11.313708
    %v144 = vmul.f32 %v128, 11.313708
    %v145 = vmul.f32 %v129, 11.313708
    %v146 = vmul.f32 %v130, 11.313708
    %v147 = vmul.f32 %v131, 11.313708
    %v148 = vmul.f32 %v132, 11.313708
    %v149 = vmul.f32 %v133, 11.313708
    %v150 = vmul.f32 %v134, 11.313708
    %v151 = vmul.f32 %v135, 11.313708
    %v152 = vmul.f32 %v136, 11.313708
    %v153 = vmul.f32 %v137, 11.313708
    %v154 = vmul.f32 %v138, 11.313708
    %v155 = vmul.f32 %v139, 11.313708
    %v156 = vadd.f32 %v140, %v44
    %v157 = vadd.f32 %v141, %v45
    %v158 = vadd.f32 %v142, %v46
    %v159 = vadd.f32 %v143, %v47
    %v160 = vadd.f32 %v144, %v48
    %v161 = vadd.f32 %v145, %v49
    %v162 = vadd.f32 %v146, %v50
    %v163 = vadd.f32 %v147, %v51
    %v164 = vadd.f32 %v148, %v52
    %v165 = vadd.f32 %v149, %v53
    %v166 = vadd.f32 %v150, %v54
    %v167 = vadd.f32 %v151, %v55
    %v168 = vadd.f32 %v152, %v56
    %v169 = vadd.f32 %v153, %v57
    %v170 = vadd.f32 %v154, %v58
    %v171 = vadd.f32 %v155, %v59
    %172 = vst [vmem:[#allocation7 + $0x8] sm:$0xff] %v156
    %173 = vst [vmem:[#allocation7 + $0x18] sm:$0xff] %v157
    %174 = vst [vmem:[#allocation7 + $0x28] sm:$0xff] %v158
    %175 = vst [vmem:[#allocation7 + $0x38] sm:$0xff] %v159
    %176 = vst [vmem:[#allocation7 + $0x48] sm:$0xff] %v160
    %177 = vst [vmem:[#allocation7 + $0x58] sm:$0xff] %v161
    %178 = vst [vmem:[#allocation7 + $0x68] sm:$0xff] %v162
    %179 = vst [vmem:[#allocation7 + $0x78] sm:$0xff] %v163
    %180 = vst [vmem:[#allocation7 + $0x88] sm:$0xff] %v164
    %181 = vst [vmem:[#allocation7 + $0x98] sm:$0xff] %v165
    %182 = vst [vmem:[#allocation7 + $0xa8] sm:$0xff] %v166
    %183 = vst [vmem:[#allocation7 + $0xb8] sm:$0xff] %v167
    %184 = vst [vmem:[#allocation7 + $0xc8] sm:$0xff] %v168
    %185 = vst [vmem:[#allocation7 + $0xd8] sm:$0xff] %v169
    %186 = vst [vmem:[#allocation7 + $0xe8] sm:$0xff] %v170
    %187 = vst [vmem:[#allocation7 + $0xf8] sm:$0xff] %v171
    // Predicated region
    $region18: #{tpu_custom_call.1} parent=1 // pred_check
      _
    $region19: #{tpu_custom_call.1} parent=1 // pred_check_branch
      %189 = sbr.rel (0) target = $region21
    $region20: #{tpu_custom_call.1} parent=1 // pred_region
      %191 = vsyncadd [#allocation4], 0
      %s192 = sshll.u32 [#allocation7], 4
      %s193 = int_to_ptr.vmem [resolvable:$true] %s192
      %s194 = sshll.u32 %s2, 4
      %s195 = int_to_ptr.hbm [resolvable:$true] %s194
      %200 = dma.vmem_to_hbm [thread:$0]  %s193, 4096, %s195, [#allocation4], 256, 256, 16
    $region21: #{tpu_custom_call.1} parent=1 // pred_fallthru
      _
    // Predicated region
    $region22: #{tpu_custom_call.1} parent=1 // pred_check
      _
    $region23: #{tpu_custom_call.1} parent=1 // pred_check_branch
      %202 = sbr.rel (0) target = $region25
    $region24: #{tpu_custom_call.1} parent=1 // pred_region
      %204 = dma.done [#allocation4], 4096
    $region25: #{tpu_custom_call.1} parent=1 // pred_fallthru
      _
    %205 = vsyncpa [#allocation3], 1
    %206 = vsyncpa [#allocation6], 1
    %207 = vsyncpa [#allocation4], 1

</llo_original>
